<compile_context>
chip_gen: v7x
topology: tpu7x:2x2x1
jax: 0.10.0
libtpu: 0.0.40
codegen_flags: <defaults>
</compile_context>

<pallas_src>
import math
import functools

import jax
import jax.numpy as jnp
from jax.experimental import pallas as pl
from jax.experimental.pallas import tpu as pltpu


def _round_up(n: int, m: int) -> int:
    return ((n + m - 1) // m) * m


def _cdiv(a: int, b: int) -> int:
    return (a + b - 1) // b


def _tpu_chip_info():
    """Best-effort (generation, num_tensorcores, vmem_bytes) of device 0."""
    kind = ""
    try:
        kind = jax.devices()[0].device_kind.lower()
    except Exception:
        pass
    k = kind.replace(" ", "")
    if "v7" in k or "7x" in k:
        gen = 7
    elif "v6" in k:
        gen = 6
    elif "v5" in k:
        gen = 5
    elif "v4" in k:
        gen = 4
    else:
        gen = 0
    # Dual-TensorCore chips (megacore / v7x): keep batch tiles even.
    if gen == 7:
        cores = 2
    elif gen in (4, 5) and ("lite" not in k) and ("5e" not in k):
        cores = 2
    else:
        cores = 1
    vmem = None
    try:
        vmem = int(pltpu.get_tpu_info().vmem_capacity_bytes)
    except Exception:
        vmem = None
    if vmem is None or vmem <= 0:
        # Conservative fallback: 64 MiB on v7x / unknown, 128 MiB otherwise.
        vmem = (64 << 20) if gen in (0, 7) else (128 << 20)
    return gen, cores, vmem


def mlp_kernel(x_ref, w1_ref, b1_ref, w2_ref, b2_ref, o_ref, acc_ref):
    """Grid = (batch tiles [parallel], hidden tiles [arbitrary reduction])."""
    k = pl.program_id(1)

    @pl.when(k == 0)
    def _init():
        acc_ref[...] = jnp.zeros_like(acc_ref)

    # fc1 chunk: [tb, in] @ [in, tk]  (compute-dtype inputs, f32 MXU accum).
    h = jnp.dot(x_ref[...], w1_ref[...], preferred_element_type=jnp.float32)
    h = h + b1_ref[...]                                   # f32 bias chunk
    # Exact (erf) GELU in f32, matching torch.nn.GELU(approximate='none').
    h = 0.5 * h * (1.0 + jax.lax.erf(h * (1.0 / math.sqrt(2.0))))
    # fc2 partial product: [tb, tk] @ [tk, out] accumulated into f32 scratch.
    acc_ref[...] += jnp.dot(h.astype(w2_ref.dtype), w2_ref[...],
                            preferred_element_type=jnp.float32)

    @pl.when(k == pl.num_programs(1) - 1)
    def _finalize():
        o_ref[...] = (acc_ref[...] + b2_ref[...]).astype(o_ref.dtype)


@functools.partial(jax.jit, static_argnames=("block_b", "block_k",
                                             "compute_dtype", "single_buffer"))
def _mlp_forward_impl(x, w1, b1, w2, b2, *, block_b, block_k, compute_dtype,
                      single_buffer):
    B, in_ft = x.shape
    hid_ft = w1.shape[1]
    out_ft = w2.shape[1]
    out_dtype = x.dtype

    gen, cores, vmem_cap = _tpu_chip_info()

    cbytes = jnp.dtype(compute_dtype).itemsize
    obytes = jnp.dtype(out_dtype).itemsize

    # Lane padding: 256 fills the 2x256x256 MXU on v6e/v7x, 128 elsewhere.
    lane_mult = 256 if gen >= 6 else 128
    # Sublane packing: sub-32-bit dtypes pack (4 // itemsize) rows per sublane.
    row_mult = 8 * max(1, 4 // cbytes)

    in_p = _round_up(in_ft, lane_mult)
    out_p = _round_up(out_ft, lane_mult)
    hid_p = _round_up(hid_ft, lane_mult)

    # ---- per-generation tile defaults --------------------------------------
    if block_k is None:
        block_k = 512 if gen >= 7 else 1024   # big K chunks amortize acc RMW
    if block_b is None:
        block_b = 256 if gen >= 7 else 512    # big B tiles amortize W re-stream

    block_k = max(lane_mult, min(block_k, hid_p))
    block_k = (block_k // lane_mult) * lane_mult
    block_b = max(row_mult, min(_round_up(block_b, row_mult),
                                _round_up(B, row_mult)))

    use_single_buffer = bool(single_buffer) and hasattr(pl, "Buffered")

    # ---- shrink tiles to a ~70%-of-physical-VMEM budget --------------------
    vmem_budget = int(0.70 * vmem_cap)

    def vmem_need(bb, bk):
        xbuf = (1 if use_single_buffer else 2) * bb * in_p * cbytes  # x tile
        w1buf = 2 * in_p * bk * cbytes                               # W1 chunk
        b1buf = 2 * 8 * bk * 4                                       # b1 chunk
        w2buf = 2 * bk * out_p * cbytes                              # W2 chunk
        b2buf = (1 if use_single_buffer else 2) * 8 * out_p * 4      # b2
        obuf = 2 * bb * out_p * obytes                               # out tile
        accbuf = bb * out_p * 4                                      # f32 acc
        return xbuf + w1buf + b1buf + w2buf + b2buf + obuf + accbuf

    while vmem_need(block_b, block_k) > vmem_budget:
        if block_k > lane_mult:
            block_k = max(lane_mult, (block_k // 2 // lane_mult) * lane_mult)
        elif block_b > row_mult:
            block_b = max(row_mult, _round_up(block_b // 2, row_mult))
        else:
            break

    # Keep both TensorCores busy on dual-core chips: even # of batch tiles.
    n_btiles = _cdiv(B, block_b)
    if cores == 2 and n_btiles > 1 and n_btiles % 2 == 1:
        block_b = max(row_mult, _round_up(_cdiv(B, n_btiles + 1), row_mult))
        n_btiles = _cdiv(B, block_b)

    # Pad hidden dim UP to a multiple of block_k instead of shrinking block_k.
    # Zero padding is exact: padded hidden cols give GELU(0 + 0-bias)=0 and the
    # matching padded W2 rows are 0, so they contribute nothing.
    hid_p = _round_up(hid_p, block_k)
    n_ktiles = hid_p // block_k

    # Matmul operands in the compute dtype (bf16 -> full-rate MXU, half the
    # HBM/VMEM bytes); biases stay f32 and are added after the f32 accumulate.
    xc = x.astype(compute_dtype)
    w1c = w1.astype(compute_dtype)
    w2c = w2.astype(compute_dtype)
    b1f = b1.astype(jnp.float32).reshape(1, hid_ft)
    b2f = b2.astype(jnp.float32).reshape(1, out_ft)

    if in_p != in_ft:
        xc = jnp.pad(xc, ((0, 0), (0, in_p - in_ft)))
        w1c = jnp.pad(w1c, ((0, in_p - in_ft), (0, 0)))
    if hid_p != hid_ft:
        w1c = jnp.pad(w1c, ((0, 0), (0, hid_p - hid_ft)))
        b1f = jnp.pad(b1f, ((0, 0), (0, hid_p - hid_ft)))
        w2c = jnp.pad(w2c, ((0, hid_p - hid_ft), (0, 0)))
    if out_p != out_ft:
        w2c = jnp.pad(w2c, ((0, 0), (0, out_p - out_ft)))
        b2f = jnp.pad(b2f, ((0, 0), (0, out_p - out_ft)))

    grid = (n_btiles, n_ktiles)

    # VMEM limit: >= what we need, never above ~85% of the chip's physical VMEM
    # (v7x has only 64 MiB per TensorCore; v5e/v6e have 128 MiB).
    need = vmem_need(block_b, block_k)
    vmem_limit = int(min(int(0.85 * vmem_cap),
                         max(int(1.25 * need), 32 << 20)))
    vmem_limit = max(vmem_limit, 16 << 20)

    # HBM traffic: weights (and b1) are re-streamed once per batch tile.
    cost = pl.CostEstimate(
        flops=2 * B * (in_p * hid_p + hid_p * out_p),
        transcendentals=B * hid_p,
        bytes_accessed=(B * in_p * cbytes
                        + n_btiles * (in_p * hid_p + hid_p * out_p) * cbytes
                        + n_btiles * hid_p * 4 + out_p * 4
                        + B * out_p * obytes),
    )

    # x (index (i,0)) and b2 (index (0,0)) never change along the inner k axis:
    # a second pipeline buffer for them is pure VMEM waste.
    x_kwargs = {"pipeline_mode": pl.Buffered(1)} if use_single_buffer else {}
    b2_kwargs = {"pipeline_mode": pl.Buffered(1)} if use_single_buffer else {}

    in_specs = [
        pl.BlockSpec((block_b, in_p), lambda i, k: (i, 0), **x_kwargs),   # x
        pl.BlockSpec((in_p, block_k), lambda i, k: (0, k)),               # W1
        pl.BlockSpec((1, block_k), lambda i, k: (0, k)),                  # b1
        pl.BlockSpec((block_k, out_p), lambda i, k: (k, 0)),              # W2
        pl.BlockSpec((1, out_p), lambda i, k: (0, 0), **b2_kwargs),       # b2
    ]

    # NOTE: a partial last batch tile computes on whatever rows Pallas fetched
    # past B; rows are independent and the writeback is clipped, so it is safe.
    out = pl.pallas_call(
        mlp_kernel,
        out_shape=jax.ShapeDtypeStruct((B, out_p), out_dtype),
        grid_spec=pltpu.PrefetchScalarGridSpec(
            num_scalar_prefetch=0,
            grid=grid,
            in_specs=in_specs,
            out_specs=pl.BlockSpec((block_b, out_p), lambda i, k: (i, 0)),
            scratch_shapes=[pltpu.VMEM((block_b, out_p), jnp.float32)],
        ),
        compiler_params=pltpu.CompilerParams(
            dimension_semantics=("parallel", "arbitrary"),
            vmem_limit_bytes=vmem_limit),
        cost_estimate=cost,
    )(xc, w1c, b1f, w2c, b2f)

    if out_p != out_ft:
        out = out[:, :out_ft]
    return out


def mlp_forward(x, w1, b1, w2, b2, *, block_b=None, block_k=None,
                compute_dtype=jnp.bfloat16):
    """fc2(GELU(fc1(x))) with [in,out]-layout weights and [1,out] biases."""
    try:
        return _mlp_forward_impl(x, w1, b1, w2, b2, block_b=block_b,
                                 block_k=block_k, compute_dtype=compute_dtype,
                                 single_buffer=True)
    except Exception:
        # Fallback for runtimes that reject pipeline_mode=pl.Buffered(1) on
        # pallas_call BlockSpecs: retrace with default double buffering.
        return _mlp_forward_impl(x, w1, b1, w2, b2, block_b=block_b,
                                 block_k=block_k, compute_dtype=compute_dtype,
                                 single_buffer=False)


def reference_mlp(x, w1, b1, w2, b2):
    h = x @ w1 + b1
    h = 0.5 * h * (1.0 + jax.lax.erf(h / jnp.sqrt(2.0)))
    return h @ w2 + b2


def _make_inputs(key, B, in_ft, hid_ft, out_ft, dtype=jnp.float32):
    kx, k1, kb1, k2, kb2 = jax.random.split(key, 5)
    x = jax.random.normal(kx, (B, in_ft), dtype=dtype)
    bound1 = 1.0 / math.sqrt(in_ft)
    w1 = jax.random.uniform(k1, (in_ft, hid_ft), dtype=dtype,
                            minval=-bound1, maxval=bound1)
    b1 = jax.random.uniform(kb1, (1, hid_ft), dtype=dtype,
                            minval=-bound1, maxval=bound1)
    bound2 = 1.0 / math.sqrt(hid_ft)
    w2 = jax.random.uniform(k2, (hid_ft, out_ft), dtype=dtype,
                            minval=-bound2, maxval=bound2)
    b2 = jax.random.uniform(kb2, (1, out_ft), dtype=dtype,
                            minval=-bound2, maxval=bound2)
    return x, w1, b1, w2, b2


if __name__ == "__main__":
    key = jax.random.PRNGKey(0)

    # Test 1: toy module config (B,in,hid,out)=(8,32,64,32), pure f32 compute
    # (exercises lane padding, single grid step).
    x, w1, b1, w2, b2 = _make_inputs(key, 8, 32, 64, 32)
    out = jax.block_until_ready(
        mlp_forward(x, w1, b1, w2, b2, block_b=256, block_k=512,
                    compute_dtype=jnp.float32))
    ref = reference_mlp(x, w1, b1, w2, b2)
    assert out.shape == ref.shape
    assert jnp.allclose(out, ref, atol=1e-5, rtol=1e-5), "f32 mismatch"

    # Test 2: multi-tile config with bf16 MXU compute: 2 batch tiles
    # ("parallel" axis) x >=2 hidden reduction tiles, non-128-multiple dims.
    x, w1, b1, w2, b2 = _make_inputs(jax.random.PRNGKey(0), 256, 96, 320, 160)
    out = jax.block_until_ready(
        mlp_forward(x, w1, b1, w2, b2, block_b=128, block_k=256,
                    compute_dtype=jnp.bfloat16))
    ref = reference_mlp(x, w1, b1, w2, b2)
    assert out.shape == ref.shape
    # bf16 matmul inputs (f32 accumulation) vs pure-f32 reference.
    assert jnp.allclose(out, ref, atol=2e-2, rtol=2e-2), "bf16 mismatch"

    # Test 3: auto (per-generation) tile defaults; hid=1280 is not a multiple
    # of the default block_k, exercising the pad-hidden-up-to-block_k path.
    x, w1, b1, w2, b2 = _make_inputs(jax.random.PRNGKey(1), 128, 384, 1280, 256)
    out = jax.block_until_ready(
        mlp_forward(x, w1, b1, w2, b2, compute_dtype=jnp.float32))
    ref = reference_mlp(x, w1, b1, w2, b2)
    assert out.shape == ref.shape
    assert jnp.allclose(out, ref, atol=1e-4, rtol=1e-4), "auto-tile mismatch"

    print("KERNEL_OK")
</pallas_src>

<mosaic_0001>
module attributes {stable_mosaic.version = 11 : i64} {
  func.func @mlp_kernel(%arg0: i32, %arg1: i32, %arg2: memref<8x128xf32, #tpu.memory_space<vmem>>, %arg3: memref<128x128xf32, #tpu.memory_space<vmem>>, %arg4: memref<1x128xf32, #tpu.memory_space<vmem>>, %arg5: memref<128x128xf32, #tpu.memory_space<vmem>>, %arg6: memref<1x128xf32, #tpu.memory_space<vmem>>, %arg7: memref<8x128xf32, #tpu.memory_space<vmem>>, %arg8: memref<8x128xf32, #tpu.memory_space<vmem>>) attributes {dimension_semantics = [#tpu.dimension_semantics<parallel>, #tpu.dimension_semantics<arbitrary>], iteration_bounds = array<i64: 1, 1>, scalar_prefetch = 0 : i64, scratch_operands = 1 : i64, tpu.core_type = #tpu.core_type<tc>, window_params = [{pipeline_mode = #tpu.pipeline_mode<synchronous>, transform_indices = @transform_0, window_bounds = array<i64: 8, 128>}, {transform_indices = @transform_1, window_bounds = array<i64: 128, 128>}, {transform_indices = @transform_2, window_bounds = array<i64: 1, 128>}, {transform_indices = @transform_3, window_bounds = array<i64: 128, 128>}, {pipeline_mode = #tpu.pipeline_mode<synchronous>, transform_indices = @transform_4, window_bounds = array<i64: 1, 128>}, {transform_indices = @transform_5, window_bounds = array<i64: 8, 128>}]} {
    %c0_i32 = arith.constant 0 : i32
    %0 = arith.cmpi eq, %arg1, %c0_i32 : i32
    %1 = arith.extui %0 : i1 to i32
    %c0_i32_0 = arith.constant 0 : i32
    %2 = arith.cmpi ne, %1, %c0_i32_0 : i32
    scf.if %2 {
      %cst_18 = arith.constant 0.000000e+00 : f32
      %25 = vector.broadcast %cst_18 : f32 to vector<8x128xf32>
      %c0_19 = arith.constant 0 : index
      %c0_20 = arith.constant 0 : index
      %26 = vector.load %arg8[%c0_19, %c0_20] : memref<8x128xf32, #tpu.memory_space<vmem>>, vector<8x128xf32>
      tpu.vector_store %arg8[%c0_19, %c0_20], %25 {strides = array<i32>} : memref<8x128xf32, #tpu.memory_space<vmem>>, vector<8x128xf32>,
    } else {
    }
    %c0 = arith.constant 0 : index
    %c0_1 = arith.constant 0 : index
    %3 = vector.load %arg2[%c0, %c0_1] : memref<8x128xf32, #tpu.memory_space<vmem>>, vector<8x128xf32>
    %c0_2 = arith.constant 0 : index
    %c0_3 = arith.constant 0 : index
    %4 = vector.load %arg3[%c0_2, %c0_3] : memref<128x128xf32, #tpu.memory_space<vmem>>, vector<128x128xf32>
    %cst = arith.constant dense<0.000000e+00> : vector<8x128xf32>
    %5 = tpu.matmul %3, %4, %cst {dimension_numbers = #tpu.dot_dimension_numbers<[1], [0], [0], [1], [0, 0, 1, 1], [], []>} : vector<8x128xf32>, vector<128x128xf32>, vector<8x128xf32> -> vector<8x128xf32>
    %c0_4 = arith.constant 0 : index
    %c0_5 = arith.constant 0 : index
    %6 = vector.load %arg4[%c0_4, %c0_5] : memref<1x128xf32, #tpu.memory_space<vmem>>, vector<1x128xf32>
    %7 = vector.broadcast %6 : vector<1x128xf32> to vector<8x128xf32>
    %8 = arith.addf %5, %7 : vector<8x128xf32>
    %cst_6 = arith.constant 5.000000e-01 : f32
    %9 = vector.broadcast %cst_6 : f32 to vector<8x128xf32>
    %10 = arith.mulf %9, %8 : vector<8x128xf32>
    %cst_7 = arith.constant 0.707106769 : f32
    %11 = vector.broadcast %cst_7 : f32 to vector<8x128xf32>
    %12 = arith.mulf %8, %11 : vector<8x128xf32>
    %13 = math.erf %12 : vector<8x128xf32>
    %cst_8 = arith.constant 1.000000e+00 : f32
    %14 = vector.broadcast %cst_8 : f32 to vector<8x128xf32>
    %15 = arith.addf %14, %13 : vector<8x128xf32>
    %16 = arith.mulf %10, %15 : vector<8x128xf32>
    %c0_9 = arith.constant 0 : index
    %c0_10 = arith.constant 0 : index
    %17 = vector.load %arg8[%c0_9, %c0_10] : memref<8x128xf32, #tpu.memory_space<vmem>>, vector<8x128xf32>
    %c0_11 = arith.constant 0 : index
    %c0_12 = arith.constant 0 : index
    %18 = vector.load %arg5[%c0_11, %c0_12] : memref<128x128xf32, #tpu.memory_space<vmem>>, vector<128x128xf32>
    %cst_13 = arith.constant dense<0.000000e+00> : vector<8x128xf32>
    %19 = tpu.matmul %16, %18, %cst_13 {dimension_numbers = #tpu.dot_dimension_numbers<[1], [0], [0], [1], [0, 0, 1, 1], [], []>} : vector<8x128xf32>, vector<128x128xf32>, vector<8x128xf32> -> vector<8x128xf32>
    %20 = arith.addf %17, %19 : vector<8x128xf32>
    %c0_14 = arith.constant 0 : index
    %c0_15 = arith.constant 0 : index
    %21 = vector.load %arg8[%c0_14, %c0_15] : memref<8x128xf32, #tpu.memory_space<vmem>>, vector<8x128xf32>
    tpu.vector_store %arg8[%c0_14, %c0_15], %20 {strides = array<i32>} : memref<8x128xf32, #tpu.memory_space<vmem>>, vector<8x128xf32>,
    %c0_i32_16 = arith.constant 0 : i32
    %22 = arith.cmpi eq, %arg1, %c0_i32_16 : i32
    %23 = arith.extui %22 : i1 to i32
    %c0_i32_17 = arith.constant 0 : i32
    %24 = arith.cmpi ne, %23, %c0_i32_17 : i32
    scf.if %24 {
      %c0_18 = arith.constant 0 : index
      %c0_19 = arith.constant 0 : index
      %25 = vector.load %arg8[%c0_18, %c0_19] : memref<8x128xf32, #tpu.memory_space<vmem>>, vector<8x128xf32>
      %c0_20 = arith.constant 0 : index
      %c0_21 = arith.constant 0 : index
      %26 = vector.load %arg6[%c0_20, %c0_21] : memref<1x128xf32, #tpu.memory_space<vmem>>, vector<1x128xf32>
      %27 = vector.broadcast %26 : vector<1x128xf32> to vector<8x128xf32>
      %28 = arith.addf %25, %27 : vector<8x128xf32>
      %c0_22 = arith.constant 0 : index
      %c0_23 = arith.constant 0 : index
      %29 = vector.load %arg7[%c0_22, %c0_23] : memref<8x128xf32, #tpu.memory_space<vmem>>, vector<8x128xf32>
      tpu.vector_store %arg7[%c0_22, %c0_23], %28 {strides = array<i32>} : memref<8x128xf32, #tpu.memory_space<vmem>>, vector<8x128xf32>,
    } else {
    }
    return
  }
  func.func @transform_0(%arg0: i32, %arg1: i32) -> (i32, i32) {
    %c0_i32 = arith.constant 0 : i32
    %c0_i32_0 = arith.constant 0 : i32
    return %arg0, %c0_i32 : i32, i32
  }
  func.func @transform_1(%arg0: i32, %arg1: i32) -> (i32, i32) {
    %c0_i32 = arith.constant 0 : i32
    %c0_i32_0 = arith.constant 0 : i32
    return %c0_i32, %arg1 : i32, i32
  }
  func.func @transform_2(%arg0: i32, %arg1: i32) -> (i32, i32) {
    %c0_i32 = arith.constant 0 : i32
    %c0_i32_0 = arith.constant 0 : i32
    return %c0_i32, %arg1 : i32, i32
  }
  func.func @transform_3(%arg0: i32, %arg1: i32) -> (i32, i32) {
    %c0_i32 = arith.constant 0 : i32
    %c0_i32_0 = arith.constant 0 : i32
    return %arg1, %c0_i32 : i32, i32
  }
  func.func @transform_4(%arg0: i32, %arg1: i32) -> (i32, i32) {
    %c0_i32 = arith.constant 0 : i32
    %c0_i32_0 = arith.constant 0 : i32
    %c0_i32_1 = arith.constant 0 : i32
    return %c0_i32, %c0_i32_0 : i32, i32
  }
  func.func @transform_5(%arg0: i32, %arg1: i32) -> (i32, i32) {
    %c0_i32 = arith.constant 0 : i32
    %c0_i32_0 = arith.constant 0 : i32
    return %arg0, %c0_i32 : i32, i32
  }
}

module attributes {stable_mosaic.version = 11 : i64} {
  func.func @mlp_kernel(%arg0: i32, %arg1: i32, %arg2: memref<8x128xf32, #tpu.memory_space<vmem>>, %arg3: memref<128x128xf32, #tpu.memory_space<vmem>>, %arg4: memref<1x128xf32, #tpu.memory_space<vmem>>, %arg5: memref<128x128xf32, #tpu.memory_space<vmem>>, %arg6: memref<1x128xf32, #tpu.memory_space<vmem>>, %arg7: memref<8x128xf32, #tpu.memory_space<vmem>>, %arg8: memref<8x128xf32, #tpu.memory_space<vmem>>) attributes {dimension_semantics = [#tpu.dimension_semantics<parallel>, #tpu.dimension_semantics<arbitrary>], iteration_bounds = array<i64: 1, 1>, scalar_prefetch = 0 : i64, scratch_operands = 1 : i64, tpu.core_type = #tpu.core_type<tc>, window_params = [{transform_indices = @transform_0, window_bounds = array<i64: 8, 128>}, {transform_indices = @transform_1, window_bounds = array<i64: 128, 128>}, {transform_indices = @transform_2, window_bounds = array<i64: 1, 128>}, {transform_indices = @transform_3, window_bounds = array<i64: 128, 128>}, {pipeline_mode = #tpu.pipeline_mode<synchronous>, transform_indices = @transform_4, window_bounds = array<i64: 1, 128>}, {transform_indices = @transform_5, window_bounds = array<i64: 8, 128>}]} {
    %c0_i32 = arith.constant 0 : i32
    %0 = arith.cmpi eq, %arg1, %c0_i32 : i32
    %1 = arith.extui %0 : i1 to i32
    %c0_i32_0 = arith.constant 0 : i32
    %2 = arith.cmpi ne, %1, %c0_i32_0 : i32
    scf.if %2 {
      %cst_18 = arith.constant 0.000000e+00 : f32
      %25 = vector.broadcast %cst_18 : f32 to vector<8x128xf32>
      %c0_19 = arith.constant 0 : index
      %c0_20 = arith.constant 0 : index
      %26 = vector.load %arg8[%c0_19, %c0_20] : memref<8x128xf32, #tpu.memory_space<vmem>>, vector<8x128xf32>
      tpu.vector_store %arg8[%c0_19, %c0_20], %25 {strides = array<i32>} : memref<8x128xf32, #tpu.memory_space<vmem>>, vector<8x128xf32>,
    } else {
    }
    %c0 = arith.constant 0 : index
    %c0_1 = arith.constant 0 : index
    %3 = vector.load %arg2[%c0, %c0_1] : memref<8x128xf32, #tpu.memory_space<vmem>>, vector<8x128xf32>
    %c0_2 = arith.constant 0 : index
    %c0_3 = arith.constant 0 : index
    %4 = vector.load %arg3[%c0_2, %c0_3] : memref<128x128xf32, #tpu.memory_space<vmem>>, vector<128x128xf32>
    %cst = arith.constant dense<0.000000e+00> : vector<8x128xf32>
    %5 = tpu.matmul %3, %4, %cst {dimension_numbers = #tpu.dot_dimension_numbers<[1], [0], [0], [1], [0, 0, 1, 1], [], []>} : vector<8x128xf32>, vector<128x128xf32>, vector<8x128xf32> -> vector<8x128xf32>
    %c0_4 = arith.constant 0 : index
    %c0_5 = arith.constant 0 : index
    %6 = vector.load %arg4[%c0_4, %c0_5] : memref<1x128xf32, #tpu.memory_space<vmem>>, vector<1x128xf32>
    %7 = vector.broadcast %6 : vector<1x128xf32> to vector<8x128xf32>
    %8 = arith.addf %5, %7 : vector<8x128xf32>
    %cst_6 = arith.constant 5.000000e-01 : f32
    %9 = vector.broadcast %cst_6 : f32 to vector<8x128xf32>
    %10 = arith.mulf %9, %8 : vector<8x128xf32>
    %cst_7 = arith.constant 0.707106769 : f32
    %11 = vector.broadcast %cst_7 : f32 to vector<8x128xf32>
    %12 = arith.mulf %8, %11 : vector<8x128xf32>
    %13 = math.erf %12 : vector<8x128xf32>
    %cst_8 = arith.constant 1.000000e+00 : f32
    %14 = vector.broadcast %cst_8 : f32 to vector<8x128xf32>
    %15 = arith.addf %14, %13 : vector<8x128xf32>
    %16 = arith.mulf %10, %15 : vector<8x128xf32>
    %c0_9 = arith.constant 0 : index
    %c0_10 = arith.constant 0 : index
    %17 = vector.load %arg8[%c0_9, %c0_10] : memref<8x128xf32, #tpu.memory_space<vmem>>, vector<8x128xf32>
    %c0_11 = arith.constant 0 : index
    %c0_12 = arith.constant 0 : index
    %18 = vector.load %arg5[%c0_11, %c0_12] : memref<128x128xf32, #tpu.memory_space<vmem>>, vector<128x128xf32>
    %cst_13 = arith.constant dense<0.000000e+00> : vector<8x128xf32>
    %19 = tpu.matmul %16, %18, %cst_13 {dimension_numbers = #tpu.dot_dimension_numbers<[1], [0], [0], [1], [0, 0, 1, 1], [], []>} : vector<8x128xf32>, vector<128x128xf32>, vector<8x128xf32> -> vector<8x128xf32>
    %20 = arith.addf %17, %19 : vector<8x128xf32>
    %c0_14 = arith.constant 0 : index
    %c0_15 = arith.constant 0 : index
    %21 = vector.load %arg8[%c0_14, %c0_15] : memref<8x128xf32, #tpu.memory_space<vmem>>, vector<8x128xf32>
    tpu.vector_store %arg8[%c0_14, %c0_15], %20 {strides = array<i32>} : memref<8x128xf32, #tpu.memory_space<vmem>>, vector<8x128xf32>,
    %c0_i32_16 = arith.constant 0 : i32
    %22 = arith.cmpi eq, %arg1, %c0_i32_16 : i32
    %23 = arith.extui %22 : i1 to i32
    %c0_i32_17 = arith.constant 0 : i32
    %24 = arith.cmpi ne, %23, %c0_i32_17 : i32
    scf.if %24 {
      %c0_18 = arith.constant 0 : index
      %c0_19 = arith.constant 0 : index
      %25 = vector.load %arg8[%c0_18, %c0_19] : memref<8x128xf32, #tpu.memory_space<vmem>>, vector<8x128xf32>
      %c0_20 = arith.constant 0 : index
      %c0_21 = arith.constant 0 : index
      %26 = vector.load %arg6[%c0_20, %c0_21] : memref<1x128xf32, #tpu.memory_space<vmem>>, vector<1x128xf32>
      %27 = vector.broadcast %26 : vector<1x128xf32> to vector<8x128xf32>
      %28 = arith.addf %25, %27 : vector<8x128xf32>
      %c0_22 = arith.constant 0 : index
      %c0_23 = arith.constant 0 : index
      %29 = vector.load %arg7[%c0_22, %c0_23] : memref<8x128xf32, #tpu.memory_space<vmem>>, vector<8x128xf32>
      tpu.vector_store %arg7[%c0_22, %c0_23], %28 {strides = array<i32>} : memref<8x128xf32, #tpu.memory_space<vmem>>, vector<8x128xf32>,
    } else {
    }
    return
  }
  func.func @transform_0(%arg0: i32, %arg1: i32) -> (i32, i32) {
    %c0_i32 = arith.constant 0 : i32
    %c0_i32_0 = arith.constant 0 : i32
    return %arg0, %c0_i32 : i32, i32
  }
  func.func @transform_1(%arg0: i32, %arg1: i32) -> (i32, i32) {
    %c0_i32 = arith.constant 0 : i32
    %c0_i32_0 = arith.constant 0 : i32
    return %c0_i32, %arg1 : i32, i32
  }
  func.func @transform_2(%arg0: i32, %arg1: i32) -> (i32, i32) {
    %c0_i32 = arith.constant 0 : i32
    %c0_i32_0 = arith.constant 0 : i32
    return %c0_i32, %arg1 : i32, i32
  }
  func.func @transform_3(%arg0: i32, %arg1: i32) -> (i32, i32) {
    %c0_i32 = arith.constant 0 : i32
    %c0_i32_0 = arith.constant 0 : i32
    return %arg1, %c0_i32 : i32, i32
  }
  func.func @transform_4(%arg0: i32, %arg1: i32) -> (i32, i32) {
    %c0_i32 = arith.constant 0 : i32
    %c0_i32_0 = arith.constant 0 : i32
    %c0_i32_1 = arith.constant 0 : i32
    return %c0_i32, %c0_i32_0 : i32, i32
  }
  func.func @transform_5(%arg0: i32, %arg1: i32) -> (i32, i32) {
    %c0_i32 = arith.constant 0 : i32
    %c0_i32_0 = arith.constant 0 : i32
    return %arg0, %c0_i32 : i32, i32
  }
}

</mosaic_0001>

<llo_original>
// kernel: _mlp_forward_impl.1
$region0: #{_mlp_forward_impl.1}
  #allocation0 [shape = 'u32[]', space=smem, size = 0x4, offset = 0x4, fixed_abs, tag = 'smem constant byte address 0x4 - core index']
  #allocation1 [shape = 'u32[144,128]{1,0:T(1,128)}', space=vmem, size = 0x12000, scoped, tag = 'internal scratch']
  #allocation2 [shape = 'f32[8,128]{1,0:T(8,128)}', space=vmem, size = 0x1000, scoped, tag = 'scratch operand']
  %s0 = inlined_call_operand.vmem [shape: f32[8,128], index: 0, kind: input, shape index: {}]
  %s1 = inlined_call_operand.vmem [shape: f32[128,128], index: 1, kind: input, shape index: {}]
  %s2 = inlined_call_operand.vmem [shape: f32[1,128], index: 2, kind: input, shape index: {}]
  %s3 = inlined_call_operand.vmem [shape: f32[128,128], index: 3, kind: input, shape index: {}]
  %s4 = inlined_call_operand.vmem [shape: f32[1,128], index: 4, kind: input, shape index: {}]
  %s5 = inlined_call_operand.hbm [shape: f32[8,128], index: 5, kind: output, shape index: {}]
  %s6 = sld [smem:[#allocation0]]
  $region38: #{_mlp_forward_impl.1} parent=0
    _
  %s8 = ssub.s32 1, %s6
  %s9 = scalar_select 0, %s8, %s6
  $region1: #{_mlp_forward_impl.1} parent=0
    #allocation3 [shape = 'u8[4096]{0}', space=vmem, size = 0x1000, scoped, tag = 'output window, operand 0, single buffered']
    #allocation4 [shape = 's32[1]{0}', space=sflag, size = 0x4, scoped, tag = 'scoped memory for _mlp_forward_impl.1']
    %10 = vsyncpa [#allocation4], 0
    // Predicated region
    $region2: #{_mlp_forward_impl.1} parent=1 // pred_check
      _
    $region3: #{_mlp_forward_impl.1} parent=1 // pred_check_branch
      %12 = sbr.rel (0) target = $region5
    $region4: #{_mlp_forward_impl.1} parent=1 // pred_region
      _
    $region5: #{_mlp_forward_impl.1} parent=1 // pred_fallthru
      _
    // Predicated region
    $region6: #{_mlp_forward_impl.1} parent=1 // pred_check
      _
    $region7: #{_mlp_forward_impl.1} parent=1 // pred_check_branch
      %14 = sbr.rel (0) target = $region9
    $region8: #{_mlp_forward_impl.1} parent=1 // pred_region
      _
    $region9: #{_mlp_forward_impl.1} parent=1 // pred_fallthru
      _
    // Predicated region
    $region10: #{_mlp_forward_impl.1} parent=1 // pred_check
      _
    $region11: #{_mlp_forward_impl.1} parent=1 // pred_check_branch
      %16 = sbr.rel (0) target = $region13
    $region12: #{_mlp_forward_impl.1} parent=1 // pred_region
      _
    $region13: #{_mlp_forward_impl.1} parent=1 // pred_fallthru
      _
    // Predicated region
    $region14: #{_mlp_forward_impl.1} parent=1 // pred_check
      _
    $region15: #{_mlp_forward_impl.1} parent=1 // pred_check_branch
      %18 = sbr.rel (0) target = $region17
    $region16: #{_mlp_forward_impl.1} parent=1 // pred_region
      _
    $region17: #{_mlp_forward_impl.1} parent=1 // pred_fallthru
      _
    // Predicated region
    $region18: #{_mlp_forward_impl.1} parent=1 // pred_check
      _
    $region19: #{_mlp_forward_impl.1} parent=1 // pred_check_branch
      %20 = sbr.rel (0) target = $region21
    $region20: #{_mlp_forward_impl.1} parent=1 // pred_region
      _
    $region21: #{_mlp_forward_impl.1} parent=1 // pred_fallthru
      _
    %p21 = scmp.eq.s32.totalorder 0, 0
    // Predicated region
    $region22: #{_mlp_forward_impl.1} parent=1 // pred_check
      %p22 = pneg %p21
    $region23: #{_mlp_forward_impl.1} parent=1 // pred_check_branch
      %24 = sbr.rel (%p22) target = $region25
    $region24: #{_mlp_forward_impl.1} parent=1 // pred_region
      %25 = vst [vmem:[#allocation2] sm:$0xff] 0.0
    $region25: #{_mlp_forward_impl.1} parent=1 // pred_fallthru
      _
    %v26 = vld [vmem:[%s0] sm:$0xff]
    %v27 = vld [vmem:[%s1] sm:$0xff]
    %v28 = vld [vmem:[%s1 + $0x8] sm:$0xff]
    %v29 = vld [vmem:[%s1 + $0x10] sm:$0xff]
    %v30 = vld [vmem:[%s1 + $0x18] sm:$0xff]
    %v31 = vld [vmem:[%s1 + $0x20] sm:$0xff]
    %v32 = vld [vmem:[%s1 + $0x28] sm:$0xff]
    %v33 = vld [vmem:[%s1 + $0x30] sm:$0xff]
    %v34 = vld [vmem:[%s1 + $0x38] sm:$0xff]
    %v35 = vld [vmem:[%s1 + $0x40] sm:$0xff]
    %v36 = vld [vmem:[%s1 + $0x48] sm:$0xff]
    %v37 = vld [vmem:[%s1 + $0x50] sm:$0xff]
    %v38 = vld [vmem:[%s1 + $0x58] sm:$0xff]
    %v39 = vld [vmem:[%s1 + $0x60] sm:$0xff]
    %v40 = vld [vmem:[%s1 + $0x68] sm:$0xff]
    %v41 = vld [vmem:[%s1 + $0x70] sm:$0xff]
    %v42 = vld [vmem:[%s1 + $0x78] sm:$0xff]
    %v43 = vld [vmem:[%s2] sm:$0x1]
    %v45 = vlaneseq
    %v46 = vshrl.u32 %v45, 7
    %v47 = vsub.s32 0, %v46
    %v48 = vrot.slane %v43, %v47
    %50 = vmatprep.subr.mxu0 0.0
    %51 = vmatpush1.msra.mxu0 %v27
    %52 = vmatprep.subr.mxu0 0.0
    %53 = vmatpush1.msra.mxu0 %v28
    %54 = vmatprep.subr.mxu0 0.0
    %55 = vmatpush1.msra.mxu0 %v29
    %56 = vmatprep.subr.mxu0 0.0
    %57 = vmatpush1.msra.mxu0 %v30
    %58 = vmatprep.subr.mxu0 0.0
    %59 = vmatpush1.msra.mxu0 %v31
    %60 = vmatprep.subr.mxu0 0.0
    %61 = vmatpush1.msra.mxu0 %v32
    %62 = vmatprep.subr.mxu0 0.0
    %63 = vmatpush1.msra.mxu0 %v33
    %64 = vmatprep.subr.mxu0 0.0
    %65 = vmatpush1.msra.mxu0 %v34
    %66 = vmatprep.subr.mxu0 0.0
    %67 = vmatpush1.msra.mxu0 %v35
    %68 = vmatprep.subr.mxu0 0.0
    %69 = vmatpush1.msra.mxu0 %v36
    %70 = vmatprep.subr.mxu0 0.0
    %71 = vmatpush1.msra.mxu0 %v37
    %72 = vmatprep.subr.mxu0 0.0
    %73 = vmatpush1.msra.mxu0 %v38
    %74 = vmatprep.subr.mxu0 0.0
    %75 = vmatpush1.msra.mxu0 %v39
    %76 = vmatprep.subr.mxu0 0.0
    %77 = vmatpush1.msra.mxu0 %v40
    %78 = vmatprep.subr.mxu0 0.0
    %79 = vmatpush1.msra.mxu0 %v41
    %80 = vmatprep.subr.mxu0 0.0
    %81 = vmatpush1.msra.mxu0 %v42
    %82 = vmatprep.subr.mxu0 0.0
    %83 = vmatpush1.msra.mxu0 0.0
    %84 = vmatprep.subr.mxu0 0.0
    %85 = vmatpush1.msra.mxu0 0.0
    %86 = vmatprep.subr.mxu0 0.0
    %87 = vmatpush1.msra.mxu0 0.0
    %88 = vmatprep.subr.mxu0 0.0
    %89 = vmatpush1.msra.mxu0 0.0
    %90 = vmatprep.subr.mxu0 0.0
    %91 = vmatpush1.msra.mxu0 0.0
    %92 = vmatprep.subr.mxu0 0.0
    %93 = vmatpush1.msra.mxu0 0.0
    %94 = vmatprep.subr.mxu0 0.0
    %95 = vmatpush1.msra.mxu0 0.0
    %96 = vmatprep.subr.mxu0 0.0
    %97 = vmatpush1.msra.mxu0 0.0
    %98 = vmatprep.subr.mxu0 0.0
    %99 = vmatpush1.msra.mxu0 0.0
    %100 = vmatprep.subr.mxu0 0.0
    %101 = vmatpush1.msra.mxu0 0.0
    %102 = vmatprep.subr.mxu0 0.0
    %103 = vmatpush1.msra.mxu0 0.0
    %104 = vmatprep.subr.mxu0 0.0
    %105 = vmatpush1.msra.mxu0 0.0
    %106 = vmatprep.subr.mxu0 0.0
    %107 = vmatpush1.msra.mxu0 0.0
    %108 = vmatprep.subr.mxu0 0.0
    %109 = vmatpush1.msra.mxu0 0.0
    %110 = vmatprep.subr.mxu0 0.0
    %111 = vmatpush1.msra.mxu0 0.0
    %112 = vmatprep.subr.mxu0 0.0
    %113 = vmatpush1.msra.mxu0 0.0
    %114 = vmatprep.mubr.f32.mxu0 0.0
    %115 = vmatmul.mubr.f32.gmra.mrb[0].mxu0 %v26
    %v116 = vpop.f32.mrb[0].mxu0
    %v117 = vadd.f32 %v48, %v116
    %v118 = vpop.f32.mrb[0].mxu0
    %119 = vdwg.mxu0
    %v120 = vmul.f32 %v117, 0.5
    %v121 = vmul.f32 %v117, 0.70710677
    %v122 = verf.f32.pop %v121
    %v123 = vadd.f32 %v122, 1.0
    %v124 = vmul.f32 %v120, %v123
    %v125 = vld [vmem:[#allocation2] sm:$0xff]
    %v126 = vld [vmem:[%s3] sm:$0xff]
    %v127 = vld [vmem:[%s3 + $0x8] sm:$0xff]
    %v128 = vld [vmem:[%s3 + $0x10] sm:$0xff]
    %v129 = vld [vmem:[%s3 + $0x18] sm:$0xff]
    %v130 = vld [vmem:[%s3 + $0x20] sm:$0xff]
    %v131 = vld [vmem:[%s3 + $0x28] sm:$0xff]
    %v132 = vld [vmem:[%s3 + $0x30] sm:$0xff]
    %v133 = vld [vmem:[%s3 + $0x38] sm:$0xff]
    %v134 = vld [vmem:[%s3 + $0x40] sm:$0xff]
    %v135 = vld [vmem:[%s3 + $0x48] sm:$0xff]
    %v136 = vld [vmem:[%s3 + $0x50] sm:$0xff]
    %v137 = vld [vmem:[%s3 + $0x58] sm:$0xff]
    %v138 = vld [vmem:[%s3 + $0x60] sm:$0xff]
    %v139 = vld [vmem:[%s3 + $0x68] sm:$0xff]
    %v140 = vld [vmem:[%s3 + $0x70] sm:$0xff]
    %v141 = vld [vmem:[%s3 + $0x78] sm:$0xff]
    %142 = vmatprep.subr.mxu0 0.0
    %143 = vmatpush1.msra.mxu0 %v126
    %144 = vmatprep.subr.mxu0 0.0
    %145 = vmatpush1.msra.mxu0 %v127
    %146 = vmatprep.subr.mxu0 0.0
    %147 = vmatpush1.msra.mxu0 %v128
    %148 = vmatprep.subr.mxu0 0.0
    %149 = vmatpush1.msra.mxu0 %v129
    %150 = vmatprep.subr.mxu0 0.0
    %151 = vmatpush1.msra.mxu0 %v130
    %152 = vmatprep.subr.mxu0 0.0
    %153 = vmatpush1.msra.mxu0 %v131
    %154 = vmatprep.subr.mxu0 0.0
    %155 = vmatpush1.msra.mxu0 %v132
    %156 = vmatprep.subr.mxu0 0.0
    %157 = vmatpush1.msra.mxu0 %v133
    %158 = vmatprep.subr.mxu0 0.0
    %159 = vmatpush1.msra.mxu0 %v134
    %160 = vmatprep.subr.mxu0 0.0
    %161 = vmatpush1.msra.mxu0 %v135
    %162 = vmatprep.subr.mxu0 0.0
    %163 = vmatpush1.msra.mxu0 %v136
    %164 = vmatprep.subr.mxu0 0.0
    %165 = vmatpush1.msra.mxu0 %v137
    %166 = vmatprep.subr.mxu0 0.0
    %167 = vmatpush1.msra.mxu0 %v138
    %168 = vmatprep.subr.mxu0 0.0
    %169 = vmatpush1.msra.mxu0 %v139
    %170 = vmatprep.subr.mxu0 0.0
    %171 = vmatpush1.msra.mxu0 %v140
    %172 = vmatprep.subr.mxu0 0.0
    %173 = vmatpush1.msra.mxu0 %v141
    %174 = vmatprep.subr.mxu0 0.0
    %175 = vmatpush1.msra.mxu0 0.0
    %176 = vmatprep.subr.mxu0 0.0
    %177 = vmatpush1.msra.mxu0 0.0
    %178 = vmatprep.subr.mxu0 0.0
    %179 = vmatpush1.msra.mxu0 0.0
    %180 = vmatprep.subr.mxu0 0.0
    %181 = vmatpush1.msra.mxu0 0.0
    %182 = vmatprep.subr.mxu0 0.0
    %183 = vmatpush1.msra.mxu0 0.0
    %184 = vmatprep.subr.mxu0 0.0
    %185 = vmatpush1.msra.mxu0 0.0
    %186 = vmatprep.subr.mxu0 0.0
    %187 = vmatpush1.msra.mxu0 0.0
    %188 = vmatprep.subr.mxu0 0.0
    %189 = vmatpush1.msra.mxu0 0.0
    %190 = vmatprep.subr.mxu0 0.0
    %191 = vmatpush1.msra.mxu0 0.0
    %192 = vmatprep.subr.mxu0 0.0
    %193 = vmatpush1.msra.mxu0 0.0
    %194 = vmatprep.subr.mxu0 0.0
    %195 = vmatpush1.msra.mxu0 0.0
    %196 = vmatprep.subr.mxu0 0.0
    %197 = vmatpush1.msra.mxu0 0.0
    %198 = vmatprep.subr.mxu0 0.0
    %199 = vmatpush1.msra.mxu0 0.0
    %200 = vmatprep.subr.mxu0 0.0
    %201 = vmatpush1.msra.mxu0 0.0
    %202 = vmatprep.subr.mxu0 0.0
    %203 = vmatpush1.msra.mxu0 0.0
    %204 = vmatprep.subr.mxu0 0.0
    %205 = vmatpush1.msra.mxu0 0.0
    %206 = vmatprep.mubr.f32.mxu0 0.0
    %207 = vmatmul.mubr.f32.gmra.mrb[0].mxu0 %v124
    %v208 = vpop.f32.mrb[0].mxu0
    %v209 = vadd.f32 0.0, %v208
    %v210 = vpop.f32.mrb[0].mxu0
    %211 = vdwg.mxu0
    %v212 = vadd.f32 %v125, %v209
    %213 = vst [vmem:[#allocation2] sm:$0xff] %v212
    // Predicated region
    $region26: #{_mlp_forward_impl.1} parent=1 // pred_check
      %p214 = pneg %p21
    $region27: #{_mlp_forward_impl.1} parent=1 // pred_check_branch
      %216 = sbr.rel (%p214) target = $region29
    $region28: #{_mlp_forward_impl.1} parent=1 // pred_region
      %v217 = vld [vmem:[#allocation2] sm:$0xff]
      %v218 = vld [vmem:[%s4] sm:$0x1]
      %v220 = vlaneseq
      %v221 = vshrl.u32 %v220, 7
      %v222 = vsub.s32 0, %v221
      %v223 = vrot.slane %v218, %v222
      %v225 = vadd.f32 %v217, %v223
      %226 = vst [vmem:[#allocation3] sm:$0xff] %v225
    $region29: #{_mlp_forward_impl.1} parent=1 // pred_fallthru
      _
    // Predicated region
    $region30: #{_mlp_forward_impl.1} parent=1 // pred_check
      _
    $region31: #{_mlp_forward_impl.1} parent=1 // pred_check_branch
      %228 = sbr.rel (0) target = $region33
    $region32: #{_mlp_forward_impl.1} parent=1 // pred_region
      %s230 = ssub.s32 128, 128
      %231 = vsyncadd [#allocation4], %s230
      %s233 = sshll.u32 [#allocation3], 4
      %s234 = int_to_ptr.vmem [resolvable:$true] %s233
      %236 = dma.vmem_to_hbm [thread:$0]  %s234, 128, %s5, [#allocation4]
    $region33: #{_mlp_forward_impl.1} parent=1 // pred_fallthru
      _
    // Predicated region
    $region34: #{_mlp_forward_impl.1} parent=1 // pred_check
      _
    $region35: #{_mlp_forward_impl.1} parent=1 // pred_check_branch
      %238 = sbr.rel (0) target = $region37
    $region36: #{_mlp_forward_impl.1} parent=1 // pred_region
      %239 = dma.done [#allocation4], 128
    $region37: #{_mlp_forward_impl.1} parent=1 // pred_fallthru
      _
    %240 = vsyncpa [#allocation4], 1

// kernel: _mlp_forward_impl.1
$region0: #{_mlp_forward_impl.1}
  #allocation0 [shape = 'u32[]', space=smem, size = 0x4, offset = 0x4, fixed_abs, tag = 'smem constant byte address 0x4 - core index']
  #allocation1 [shape = 'u32[144,128]{1,0:T(1,128)}', space=vmem, size = 0x12000, scoped, tag = 'internal scratch']
  #allocation2 [shape = 'f32[8,128]{1,0:T(8,128)}', space=vmem, size = 0x1000, scoped, tag = 'scratch operand']
  %s0 = inlined_call_operand.vmem [shape: f32[8,128], index: 0, kind: input, shape index: {}]
  %s1 = inlined_call_operand.vmem [shape: f32[128,128], index: 1, kind: input, shape index: {}]
  %s2 = inlined_call_operand.vmem [shape: f32[1,128], index: 2, kind: input, shape index: {}]
  %s3 = inlined_call_operand.vmem [shape: f32[128,128], index: 3, kind: input, shape index: {}]
  %s4 = inlined_call_operand.vmem [shape: f32[1,128], index: 4, kind: input, shape index: {}]
  %s5 = inlined_call_operand.hbm [shape: f32[8,128], index: 5, kind: output, shape index: {}]
  %s6 = sld [smem:[#allocation0]]
  $region38: #{_mlp_forward_impl.1} parent=0
    _
  %s8 = ssub.s32 1, %s6
  %s9 = scalar_select 0, %s8, %s6
  $region1: #{_mlp_forward_impl.1} parent=0
    #allocation3 [shape = 'u8[4096]{0}', space=vmem, size = 0x1000, scoped, tag = 'output window, operand 0, single buffered']
    #allocation4 [shape = 's32[1]{0}', space=sflag, size = 0x4, scoped, tag = 'scoped memory for _mlp_forward_impl.1']
    %10 = vsyncpa [#allocation4], 0
    // Predicated region
    $region2: #{_mlp_forward_impl.1} parent=1 // pred_check
      _
    $region3: #{_mlp_forward_impl.1} parent=1 // pred_check_branch
      %12 = sbr.rel (0) target = $region5
    $region4: #{_mlp_forward_impl.1} parent=1 // pred_region
      _
    $region5: #{_mlp_forward_impl.1} parent=1 // pred_fallthru
      _
    // Predicated region
    $region6: #{_mlp_forward_impl.1} parent=1 // pred_check
      _
    $region7: #{_mlp_forward_impl.1} parent=1 // pred_check_branch
      %14 = sbr.rel (0) target = $region9
    $region8: #{_mlp_forward_impl.1} parent=1 // pred_region
      _
    $region9: #{_mlp_forward_impl.1} parent=1 // pred_fallthru
      _
    // Predicated region
    $region10: #{_mlp_forward_impl.1} parent=1 // pred_check
      _
    $region11: #{_mlp_forward_impl.1} parent=1 // pred_check_branch
      %16 = sbr.rel (0) target = $region13
    $region12: #{_mlp_forward_impl.1} parent=1 // pred_region
      _
    $region13: #{_mlp_forward_impl.1} parent=1 // pred_fallthru
      _
    // Predicated region
    $region14: #{_mlp_forward_impl.1} parent=1 // pred_check
      _
    $region15: #{_mlp_forward_impl.1} parent=1 // pred_check_branch
      %18 = sbr.rel (0) target = $region17
    $region16: #{_mlp_forward_impl.1} parent=1 // pred_region
      _
    $region17: #{_mlp_forward_impl.1} parent=1 // pred_fallthru
      _
    // Predicated region
    $region18: #{_mlp_forward_impl.1} parent=1 // pred_check
      _
    $region19: #{_mlp_forward_impl.1} parent=1 // pred_check_branch
      %20 = sbr.rel (0) target = $region21
    $region20: #{_mlp_forward_impl.1} parent=1 // pred_region
      _
    $region21: #{_mlp_forward_impl.1} parent=1 // pred_fallthru
      _
    %p21 = scmp.eq.s32.totalorder 0, 0
    // Predicated region
    $region22: #{_mlp_forward_impl.1} parent=1 // pred_check
      %p22 = pneg %p21
    $region23: #{_mlp_forward_impl.1} parent=1 // pred_check_branch
      %24 = sbr.rel (%p22) target = $region25
    $region24: #{_mlp_forward_impl.1} parent=1 // pred_region
      %25 = vst [vmem:[#allocation2] sm:$0xff] 0.0
    $region25: #{_mlp_forward_impl.1} parent=1 // pred_fallthru
      _
    %v26 = vld [vmem:[%s0] sm:$0xff]
    %v27 = vld [vmem:[%s1] sm:$0xff]
    %v28 = vld [vmem:[%s1 + $0x8] sm:$0xff]
    %v29 = vld [vmem:[%s1 + $0x10] sm:$0xff]
    %v30 = vld [vmem:[%s1 + $0x18] sm:$0xff]
    %v31 = vld [vmem:[%s1 + $0x20] sm:$0xff]
    %v32 = vld [vmem:[%s1 + $0x28] sm:$0xff]
    %v33 = vld [vmem:[%s1 + $0x30] sm:$0xff]
    %v34 = vld [vmem:[%s1 + $0x38] sm:$0xff]
    %v35 = vld [vmem:[%s1 + $0x40] sm:$0xff]
    %v36 = vld [vmem:[%s1 + $0x48] sm:$0xff]
    %v37 = vld [vmem:[%s1 + $0x50] sm:$0xff]
    %v38 = vld [vmem:[%s1 + $0x58] sm:$0xff]
    %v39 = vld [vmem:[%s1 + $0x60] sm:$0xff]
    %v40 = vld [vmem:[%s1 + $0x68] sm:$0xff]
    %v41 = vld [vmem:[%s1 + $0x70] sm:$0xff]
    %v42 = vld [vmem:[%s1 + $0x78] sm:$0xff]
    %v43 = vld [vmem:[%s2] sm:$0x1]
    %v45 = vlaneseq
    %v46 = vshrl.u32 %v45, 7
    %v47 = vsub.s32 0, %v46
    %v48 = vrot.slane %v43, %v47
    %50 = vmatprep.subr.mxu0 0.0
    %51 = vmatpush1.msra.mxu0 %v27
    %52 = vmatprep.subr.mxu0 0.0
    %53 = vmatpush1.msra.mxu0 %v28
    %54 = vmatprep.subr.mxu0 0.0
    %55 = vmatpush1.msra.mxu0 %v29
    %56 = vmatprep.subr.mxu0 0.0
    %57 = vmatpush1.msra.mxu0 %v30
    %58 = vmatprep.subr.mxu0 0.0
    %59 = vmatpush1.msra.mxu0 %v31
    %60 = vmatprep.subr.mxu0 0.0
    %61 = vmatpush1.msra.mxu0 %v32
    %62 = vmatprep.subr.mxu0 0.0
    %63 = vmatpush1.msra.mxu0 %v33
    %64 = vmatprep.subr.mxu0 0.0
    %65 = vmatpush1.msra.mxu0 %v34
    %66 = vmatprep.subr.mxu0 0.0
    %67 = vmatpush1.msra.mxu0 %v35
    %68 = vmatprep.subr.mxu0 0.0
    %69 = vmatpush1.msra.mxu0 %v36
    %70 = vmatprep.subr.mxu0 0.0
    %71 = vmatpush1.msra.mxu0 %v37
    %72 = vmatprep.subr.mxu0 0.0
    %73 = vmatpush1.msra.mxu0 %v38
    %74 = vmatprep.subr.mxu0 0.0
    %75 = vmatpush1.msra.mxu0 %v39
    %76 = vmatprep.subr.mxu0 0.0
    %77 = vmatpush1.msra.mxu0 %v40
    %78 = vmatprep.subr.mxu0 0.0
    %79 = vmatpush1.msra.mxu0 %v41
    %80 = vmatprep.subr.mxu0 0.0
    %81 = vmatpush1.msra.mxu0 %v42
    %82 = vmatprep.subr.mxu0 0.0
    %83 = vmatpush1.msra.mxu0 0.0
    %84 = vmatprep.subr.mxu0 0.0
    %85 = vmatpush1.msra.mxu0 0.0
    %86 = vmatprep.subr.mxu0 0.0
    %87 = vmatpush1.msra.mxu0 0.0
    %88 = vmatprep.subr.mxu0 0.0
    %89 = vmatpush1.msra.mxu0 0.0
    %90 = vmatprep.subr.mxu0 0.0
    %91 = vmatpush1.msra.mxu0 0.0
    %92 = vmatprep.subr.mxu0 0.0
    %93 = vmatpush1.msra.mxu0 0.0
    %94 = vmatprep.subr.mxu0 0.0
    %95 = vmatpush1.msra.mxu0 0.0
    %96 = vmatprep.subr.mxu0 0.0
    %97 = vmatpush1.msra.mxu0 0.0
    %98 = vmatprep.subr.mxu0 0.0
    %99 = vmatpush1.msra.mxu0 0.0
    %100 = vmatprep.subr.mxu0 0.0
    %101 = vmatpush1.msra.mxu0 0.0
    %102 = vmatprep.subr.mxu0 0.0
    %103 = vmatpush1.msra.mxu0 0.0
    %104 = vmatprep.subr.mxu0 0.0
    %105 = vmatpush1.msra.mxu0 0.0
    %106 = vmatprep.subr.mxu0 0.0
    %107 = vmatpush1.msra.mxu0 0.0
    %108 = vmatprep.subr.mxu0 0.0
    %109 = vmatpush1.msra.mxu0 0.0
    %110 = vmatprep.subr.mxu0 0.0
    %111 = vmatpush1.msra.mxu0 0.0
    %112 = vmatprep.subr.mxu0 0.0
    %113 = vmatpush1.msra.mxu0 0.0
    %114 = vmatprep.mubr.f32.mxu0 0.0
    %115 = vmatmul.mubr.f32.gmra.mrb[0].mxu0 %v26
    %v116 = vpop.f32.mrb[0].mxu0
    %v117 = vadd.f32 %v48, %v116
    %v118 = vpop.f32.mrb[0].mxu0
    %119 = vdwg.mxu0
    %v120 = vmul.f32 %v117, 0.5
    %v121 = vmul.f32 %v117, 0.70710677
    %v122 = verf.f32.pop %v121
    %v123 = vadd.f32 %v122, 1.0
    %v124 = vmul.f32 %v120, %v123
    %v125 = vld [vmem:[#allocation2] sm:$0xff]
    %v126 = vld [vmem:[%s3] sm:$0xff]
    %v127 = vld [vmem:[%s3 + $0x8] sm:$0xff]
    %v128 = vld [vmem:[%s3 + $0x10] sm:$0xff]
    %v129 = vld [vmem:[%s3 + $0x18] sm:$0xff]
    %v130 = vld [vmem:[%s3 + $0x20] sm:$0xff]
    %v131 = vld [vmem:[%s3 + $0x28] sm:$0xff]
    %v132 = vld [vmem:[%s3 + $0x30] sm:$0xff]
    %v133 = vld [vmem:[%s3 + $0x38] sm:$0xff]
    %v134 = vld [vmem:[%s3 + $0x40] sm:$0xff]
    %v135 = vld [vmem:[%s3 + $0x48] sm:$0xff]
    %v136 = vld [vmem:[%s3 + $0x50] sm:$0xff]
    %v137 = vld [vmem:[%s3 + $0x58] sm:$0xff]
    %v138 = vld [vmem:[%s3 + $0x60] sm:$0xff]
    %v139 = vld [vmem:[%s3 + $0x68] sm:$0xff]
    %v140 = vld [vmem:[%s3 + $0x70] sm:$0xff]
    %v141 = vld [vmem:[%s3 + $0x78] sm:$0xff]
    %142 = vmatprep.subr.mxu0 0.0
    %143 = vmatpush1.msra.mxu0 %v126
    %144 = vmatprep.subr.mxu0 0.0
    %145 = vmatpush1.msra.mxu0 %v127
    %146 = vmatprep.subr.mxu0 0.0
    %147 = vmatpush1.msra.mxu0 %v128
    %148 = vmatprep.subr.mxu0 0.0
    %149 = vmatpush1.msra.mxu0 %v129
    %150 = vmatprep.subr.mxu0 0.0
    %151 = vmatpush1.msra.mxu0 %v130
    %152 = vmatprep.subr.mxu0 0.0
    %153 = vmatpush1.msra.mxu0 %v131
    %154 = vmatprep.subr.mxu0 0.0
    %155 = vmatpush1.msra.mxu0 %v132
    %156 = vmatprep.subr.mxu0 0.0
    %157 = vmatpush1.msra.mxu0 %v133
    %158 = vmatprep.subr.mxu0 0.0
    %159 = vmatpush1.msra.mxu0 %v134
    %160 = vmatprep.subr.mxu0 0.0
    %161 = vmatpush1.msra.mxu0 %v135
    %162 = vmatprep.subr.mxu0 0.0
    %163 = vmatpush1.msra.mxu0 %v136
    %164 = vmatprep.subr.mxu0 0.0
    %165 = vmatpush1.msra.mxu0 %v137
    %166 = vmatprep.subr.mxu0 0.0
    %167 = vmatpush1.msra.mxu0 %v138
    %168 = vmatprep.subr.mxu0 0.0
    %169 = vmatpush1.msra.mxu0 %v139
    %170 = vmatprep.subr.mxu0 0.0
    %171 = vmatpush1.msra.mxu0 %v140
    %172 = vmatprep.subr.mxu0 0.0
    %173 = vmatpush1.msra.mxu0 %v141
    %174 = vmatprep.subr.mxu0 0.0
    %175 = vmatpush1.msra.mxu0 0.0
    %176 = vmatprep.subr.mxu0 0.0
    %177 = vmatpush1.msra.mxu0 0.0
    %178 = vmatprep.subr.mxu0 0.0
    %179 = vmatpush1.msra.mxu0 0.0
    %180 = vmatprep.subr.mxu0 0.0
    %181 = vmatpush1.msra.mxu0 0.0
    %182 = vmatprep.subr.mxu0 0.0
    %183 = vmatpush1.msra.mxu0 0.0
    %184 = vmatprep.subr.mxu0 0.0
    %185 = vmatpush1.msra.mxu0 0.0
    %186 = vmatprep.subr.mxu0 0.0
    %187 = vmatpush1.msra.mxu0 0.0
    %188 = vmatprep.subr.mxu0 0.0
    %189 = vmatpush1.msra.mxu0 0.0
    %190 = vmatprep.subr.mxu0 0.0
    %191 = vmatpush1.msra.mxu0 0.0
    %192 = vmatprep.subr.mxu0 0.0
    %193 = vmatpush1.msra.mxu0 0.0
    %194 = vmatprep.subr.mxu0 0.0
    %195 = vmatpush1.msra.mxu0 0.0
    %196 = vmatprep.subr.mxu0 0.0
    %197 = vmatpush1.msra.mxu0 0.0
    %198 = vmatprep.subr.mxu0 0.0
    %199 = vmatpush1.msra.mxu0 0.0
    %200 = vmatprep.subr.mxu0 0.0
    %201 = vmatpush1.msra.mxu0 0.0
    %202 = vmatprep.subr.mxu0 0.0
    %203 = vmatpush1.msra.mxu0 0.0
    %204 = vmatprep.subr.mxu0 0.0
    %205 = vmatpush1.msra.mxu0 0.0
    %206 = vmatprep.mubr.f32.mxu0 0.0
    %207 = vmatmul.mubr.f32.gmra.mrb[0].mxu0 %v124
    %v208 = vpop.f32.mrb[0].mxu0
    %v209 = vadd.f32 0.0, %v208
    %v210 = vpop.f32.mrb[0].mxu0
    %211 = vdwg.mxu0
    %v212 = vadd.f32 %v125, %v209
    %213 = vst [vmem:[#allocation2] sm:$0xff] %v212
    // Predicated region
    $region26: #{_mlp_forward_impl.1} parent=1 // pred_check
      %p214 = pneg %p21
    $region27: #{_mlp_forward_impl.1} parent=1 // pred_check_branch
      %216 = sbr.rel (%p214) target = $region29
    $region28: #{_mlp_forward_impl.1} parent=1 // pred_region
      %v217 = vld [vmem:[#allocation2] sm:$0xff]
      %v218 = vld [vmem:[%s4] sm:$0x1]
      %v220 = vlaneseq
      %v221 = vshrl.u32 %v220, 7
      %v222 = vsub.s32 0, %v221
      %v223 = vrot.slane %v218, %v222
      %v225 = vadd.f32 %v217, %v223
      %226 = vst [vmem:[#allocation3] sm:$0xff] %v225
    $region29: #{_mlp_forward_impl.1} parent=1 // pred_fallthru
      _
    // Predicated region
    $region30: #{_mlp_forward_impl.1} parent=1 // pred_check
      _
    $region31: #{_mlp_forward_impl.1} parent=1 // pred_check_branch
      %228 = sbr.rel (0) target = $region33
    $region32: #{_mlp_forward_impl.1} parent=1 // pred_region
      %s230 = ssub.s32 128, 128
      %231 = vsyncadd [#allocation4], %s230
      %s233 = sshll.u32 [#allocation3], 4
      %s234 = int_to_ptr.vmem [resolvable:$true] %s233
      %236 = dma.vmem_to_hbm [thread:$0]  %s234, 128, %s5, [#allocation4]
    $region33: #{_mlp_forward_impl.1} parent=1 // pred_fallthru
      _
    // Predicated region
    $region34: #{_mlp_forward_impl.1} parent=1 // pred_check
      _
    $region35: #{_mlp_forward_impl.1} parent=1 // pred_check_branch
      %238 = sbr.rel (0) target = $region37
    $region36: #{_mlp_forward_impl.1} parent=1 // pred_region
      %239 = dma.done [#allocation4], 128
    $region37: #{_mlp_forward_impl.1} parent=1 // pred_fallthru
      _
    %240 = vsyncpa [#allocation4], 1

</llo_original>
